<compile_context>
chip_gen: v6e
topology: v6e:2x2x1
jax: 0.10.0
libtpu: 0.0.40
codegen_flags: <defaults>
</compile_context>

<pallas_src>
import functools
import math

import jax
import jax.numpy as jnp
import numpy as np
from jax import lax
from jax.experimental import pallas as pl
from jax.experimental.pallas import tpu as pltpu


def _downsample_conv_kernel(body_ref, halo_ref, w01_ref, w2_ref, b_ref, o_ref,
                            *, nb, toh, ow, cin):
    """One block of NB images x TOH output rows.

    body_ref : (NB, TOH, 2, OW+1, 2*C)   row-pairs TOH*i .. TOH*(i+1)-1
    halo_ref : (NB, 1,   2, OW+1, 2*C)   row-pair  TOH*(i+1) (1-row-pair halo)
    w01_ref  : (3, Cout_p, 2*C)          weights for kw in {0,1}, per kh
    w2_ref   : (3, Cout_p,   C)          weights for kw == 2,     per kh
    b_ref    : (Cout_p, 1)               f32 bias
    o_ref    : (1, Cout_p, NB*TOH*OW)    channel-major, lane-dense output block
    """
    body = body_ref[...]                        # (NB, TOH, 2, OW+1, 2C)  bf16
    halo = halo_ref[...]                        # (NB, 1,   2, OW+1, 2C)

    rows_kh0 = body[:, :, 0]                    # padded rows 2*oh
    rows_kh1 = body[:, :, 1]                    # padded rows 2*oh + 1
    if toh > 1:                                 # padded rows 2*oh + 2 (halo)
        rows_kh2 = jnp.concatenate([body[:, 1:, 0], halo[:, :, 0]], axis=1)
    else:
        rows_kh2 = halo[:, :, 0]

    m = nb * toh * ow
    cout_p = o_ref.shape[1]

    # Bias folded into the accumulator init (saves one M x Cout_p VPU pass).
    acc = jnp.broadcast_to(b_ref[...], (cout_p, m)).astype(jnp.float32)

    # (Cout_p, K) x (M, K) -> (Cout_p, M): q@k.T-style contraction, so the
    # accumulator comes out of the MXU already in store orientation.
    dn = (((1,), (1,)), ((), ()))
    for kh, rows in enumerate((rows_kh0, rows_kh1, rows_kh2)):
        # kw in {0,1}: first OW column-pairs, all 2*C lanes (even|odd columns).
        p01 = rows[:, :, :ow, :].reshape(m, 2 * cin)
        acc = acc + lax.dot_general(w01_ref[kh], p01, dn,
                                    preferred_element_type=jnp.float32)
        # kw == 2: column-pairs 1..OW, even-column lanes only.
        p2 = rows[:, :, 1:, :cin].reshape(m, cin)
        acc = acc + lax.dot_general(w2_ref[kh], p2, dn,
                                    preferred_element_type=jnp.float32)

    o_ref[0] = acc.astype(o_ref.dtype)


def _vmem_capacity_bytes():
    try:
        cap = int(pltpu.get_tpu_info().vmem_capacity_bytes)
        if cap >= 16 * 1024 * 1024:
            return cap
    except Exception:
        pass
    return 64 * 1024 * 1024        # conservative default: v7x per-TC VMEM


def _pick_blocks(n, oh, ow, cin, cout_p, in_isz, out_isz, target_bytes, hard_cap):
    """Pick (NB images per step, TOH output rows per step), sized by bytes."""

    def body_bytes(nb, toh):
        return nb * toh * 2 * (ow + 1) * 2 * cin * in_isz

    def footprint(nb, toh):
        body = body_bytes(nb, toh)
        halo = nb * 2 * (ow + 1) * 2 * cin * in_isz
        out = cout_p * nb * toh * ow * out_isz
        w = 9 * cin * cout_p * in_isz
        acc = cout_p * nb * toh * ow * 4
        # double-buffered body/halo/out + single-buffered weights + live temps
        return 2 * (body + halo + out) + w + 3 * body + acc

    per_image = body_bytes(1, oh)

    # --- small images: fold whole images into a batch block -----------------
    if n > 1 and per_image <= target_bytes:
        divs = [d for d in range(1, n + 1) if n % d == 0]
        cands = [d for d in divs
                 if d <= max(1, n // 2)                 # keep >= 2 grid steps
                 and body_bytes(d, oh) <= target_bytes
                 and footprint(d, oh) <= hard_cap]
        if cands:
            nb = max(cands)
            if nb > 1:
                return nb, oh

    # --- large images: block over output rows (NB == 1) ---------------------
    # Legal TOH: TOH*OW is a multiple of 128 (lane-dense stores) or the block
    # spans the whole padded image (n_hblk == 1).
    step = 128 // math.gcd(ow, 128)
    cand = sorted(set(list(range(step, oh + 1, step)) + [oh]))
    fits_cap = [t for t in cand if footprint(1, t) <= hard_cap]
    if n == 1:
        # Prefer >= 2 row blocks so both v7x TensorCores get work.
        multi = [t for t in fits_cap if t < oh]
        if multi:
            fits_cap = multi
    if fits_cap:
        under = [t for t in fits_cap if body_bytes(1, t) <= target_bytes]
        if under:
            # minimize padded-row waste, then take the largest block
            toh = min(under, key=lambda t: (math.ceil(oh / t) * t - oh, -t))
        else:
            toh = min(fits_cap)
    else:
        # TODO(synk): extreme C*OW where no legal block fits VMEM would need an
        # extra output-column grid axis; take the smallest legal block instead.
        toh = min(cand, key=lambda t: footprint(1, t))
    return 1, toh


def _const_spec(block_shape, index_map):
    """BlockSpec for grid-invariant operands: single-buffered if supported."""
    try:
        return pl.BlockSpec(block_shape, index_map, pipeline_mode=pl.Buffered(1))
    except TypeError:
        return pl.BlockSpec(block_shape, index_map)


def downsample_forward(x_nchw, weight, bias, *, compute_dtype=jnp.bfloat16,
                       target_block_bytes=2 * 1024 * 1024):
    """Conv2d(C, C, k=3, stride=2, padding=1) forward.  x_nchw: (N, C, H, W)."""
    N, C, H, W = x_nchw.shape
    Cout = weight.shape[0]
    OH = (H - 1) // 2 + 1
    OW = (W - 1) // 2 + 1
    Cout_p = -(-Cout // 8) * 8                 # sublane-align the channel dim

    out_dtype = x_nchw.dtype
    in_isz = jnp.dtype(compute_dtype).itemsize
    out_isz = jnp.dtype(out_dtype).itemsize

    vmem_cap = _vmem_capacity_bytes()
    hard_cap = max(8 * 1024 * 1024, int(0.45 * vmem_cap))

    NB, TOH = _pick_blocks(N, OH, OW, C, Cout_p, in_isz, out_isz,
                           target_block_bytes, hard_cap)
    OH_pad = -(-OH // TOH) * TOH
    n_hblk = OH_pad // TOH
    NBLK = N // NB                              # NB always divides N

    Hp = 2 * OH_pad + 2                         # padded height (top pad 1)
    Wp = 2 * (OW + 1)                           # padded width  (left pad 1)

    # --- glue (one fused XLA pass): NCHW -> NHWC, bf16 cast, pad, reshape ---
    x = jnp.transpose(x_nchw, (0, 2, 3, 1)).astype(compute_dtype)    # (N,H,W,C)
    xp = jnp.pad(x, ((0, 0), (1, Hp - H - 1), (1, Wp - W - 1), (0, 0)))
    # Row-major, so this reshape is free: H->(row-pair,2), (W,C)->(col-pair,2C)
    xr = xp.reshape(N, OH_pad + 1, 2, OW + 1, 2 * C)

    # weights (Cout, Cin, 3, 3) -> pre-transposed (kh, Cout_p, K) so the MXU
    # result lands directly in (Cout_p, M) orientation (no in-kernel transpose)
    w_t = jnp.transpose(weight, (2, 3, 1, 0))                        # (3,3,C,Cout)
    w_t = jnp.pad(w_t, ((0, 0), (0, 0), (0, 0), (0, Cout_p - Cout)))
    w01t = jnp.transpose(w_t[:, 0:2], (0, 3, 1, 2)).reshape(3, Cout_p, 2 * C)
    w01t = w01t.astype(compute_dtype)                                # (3,Cout_p,2C)
    w2t = jnp.transpose(w_t[:, 2], (0, 2, 1)).astype(compute_dtype)  # (3,Cout_p,C)
    b = jnp.pad(bias.astype(jnp.float32), (0, Cout_p - Cout)).reshape(Cout_p, 1)

    kernel = functools.partial(_downsample_conv_kernel,
                               nb=NB, toh=TOH, ow=OW, cin=C)

    # VMEM estimate -> scoped limit (always set, clamped to <= 75% of physical
    # VMEM so v7x's 64 MiB per-TensorCore budget is never over-asked).
    body_bytes = NB * TOH * 2 * (OW + 1) * 2 * C * in_isz
    halo_bytes = NB * 2 * (OW + 1) * 2 * C * in_isz
    w_bytes = 9 * C * Cout_p * in_isz + Cout_p * 128 * 4
    out_bytes = Cout_p * NB * TOH * OW * out_isz
    acc_bytes = Cout_p * NB * TOH * OW * 4
    vmem_est = (2 * (body_bytes + halo_bytes + out_bytes)
                + w_bytes + 3 * body_bytes + acc_bytes)
    vmem_limit = int(min(vmem_cap * 3 // 4,
                         max(32 * 1024 * 1024, vmem_est * 5 // 4)))

    out = pl.pallas_call(
        kernel,
        out_shape=jax.ShapeDtypeStruct((NBLK, Cout_p, NB * OH_pad * OW),
                                       out_dtype),
        grid=(NBLK, n_hblk),
        in_specs=[
            pl.BlockSpec((NB, TOH, 2, OW + 1, 2 * C),
                         lambda bb, i: (bb, i, 0, 0, 0)),
            # TODO(synk): the halo could be merged into the body DMA with
            # pl.Element indexing (one fewer descriptor per step).
            pl.BlockSpec((NB, 1, 2, OW + 1, 2 * C),
                         lambda bb, i: (bb, TOH * (i + 1), 0, 0, 0)),
            _const_spec((3, Cout_p, 2 * C), lambda bb, i: (0, 0, 0)),
            _const_spec((3, Cout_p, C), lambda bb, i: (0, 0, 0)),
            _const_spec((Cout_p, 1), lambda bb, i: (0, 0)),
        ],
        out_specs=pl.BlockSpec((1, Cout_p, NB * TOH * OW),
                               lambda bb, i: (bb, 0, i)),
        compiler_params=pltpu.CompilerParams(
            dimension_semantics=("parallel", "parallel"),
            vmem_limit_bytes=vmem_limit),
    )(xr, xr, w01t, w2t, b)

    # Un-flatten.  When NB == 1 the transpose only moves a size-1 axis, so XLA
    # treats it as a bitcast and the output is already NCHW, as before.
    out = out.reshape(NBLK, Cout_p, NB, OH_pad, OW)
    out = jnp.transpose(out, (0, 2, 1, 3, 4)).reshape(N, Cout_p, OH_pad, OW)
    if Cout_p != Cout or OH_pad != OH:
        out = out[:, :Cout, :OH, :]
    return out


def _reference_conv(x_nchw, weight, bias):
    y = lax.conv_general_dilated(
        x_nchw, weight,
        window_strides=(2, 2), padding=((1, 1), (1, 1)),
        dimension_numbers=("NCHW", "OIHW", "NCHW"),
    )
    return y + bias.reshape(1, -1, 1, 1)


if __name__ == "__main__":
    key = jax.random.PRNGKey(0)
    N, C, H, W = 2, 4, 16, 16

    kx, kw, kb = jax.random.split(key, 3)
    x = jax.random.normal(kx, (N, C, H, W), dtype=jnp.float32)

    # deterministic Conv2d-style init: uniform(-1/sqrt(fan_in), 1/sqrt(fan_in))
    fan_in = C * 3 * 3
    bound = 1.0 / math.sqrt(fan_in)
    weight = jax.random.uniform(kw, (C, C, 3, 3), jnp.float32, -bound, bound)
    bias = jax.random.uniform(kb, (C,), jnp.float32, -bound, bound)

    fwd = jax.jit(downsample_forward)
    y = jax.block_until_ready(fwd(x, weight, bias))

    y_ref = jax.block_until_ready(_reference_conv(x, weight, bias))
    # bf16 matmul operands with f32 accumulation -> relaxed tolerance.
    np.testing.assert_allclose(np.asarray(y), np.asarray(y_ref),
                               rtol=5e-2, atol=5e-2)

    assert y.shape == (N, C, H // 2, W // 2)
    print("KERNEL_OK")
</pallas_src>

<mosaic_0001>
module attributes {stable_mosaic.version = 11 : i64} {
  func.func @_downsample_conv_kernel(%arg0: i32, %arg1: i32, %arg2: memref<1x8x2x9x8xbf16, #tpu.memory_space<vmem>>, %arg3: memref<1x1x2x9x8xbf16, #tpu.memory_space<vmem>>, %arg4: memref<3x8x8xbf16, #tpu.memory_space<vmem>>, %arg5: memref<3x8x4xbf16, #tpu.memory_space<vmem>>, %arg6: memref<8x1xf32, #tpu.memory_space<vmem>>, %arg7: memref<1x8x64xf32, #tpu.memory_space<vmem>>) attributes {dimension_semantics = [#tpu.dimension_semantics<parallel>, #tpu.dimension_semantics<parallel>], iteration_bounds = array<i64: 2, 1>, scalar_prefetch = 0 : i64, scratch_operands = 0 : i64, tpu.core_type = #tpu.core_type<tc>, window_params = [{transform_indices = @transform_0, window_bounds = array<i64: 1, 8, 2, 9, 8>}, {transform_indices = @transform_1, window_bounds = array<i64: 1, 1, 2, 9, 8>}, {pipeline_mode = #tpu.pipeline_mode<synchronous>, transform_indices = @transform_2, window_bounds = array<i64: 3, 8, 8>}, {pipeline_mode = #tpu.pipeline_mode<synchronous>, transform_indices = @transform_3, window_bounds = array<i64: 3, 8, 4>}, {pipeline_mode = #tpu.pipeline_mode<synchronous>, transform_indices = @transform_4, window_bounds = array<i64: 8, 1>}, {transform_indices = @transform_5, window_bounds = array<i64: 1, 8, 64>}]} {
    %c0 = arith.constant 0 : index
    %c0_0 = arith.constant 0 : index
    %c0_1 = arith.constant 0 : index
    %c0_2 = arith.constant 0 : index
    %c0_3 = arith.constant 0 : index
    %0 = vector.load %arg2[%c0, %c0_0, %c0_1, %c0_2, %c0_3] : memref<1x8x2x9x8xbf16, #tpu.memory_space<vmem>>, vector<1x8x2x9x8xbf16>
    %c0_4 = arith.constant 0 : index
    %c0_5 = arith.constant 0 : index
    %c0_6 = arith.constant 0 : index
    %c0_7 = arith.constant 0 : index
    %c0_8 = arith.constant 0 : index
    %1 = vector.load %arg3[%c0_4, %c0_5, %c0_6, %c0_7, %c0_8] : memref<1x1x2x9x8xbf16, #tpu.memory_space<vmem>>, vector<1x1x2x9x8xbf16>
    %2 = vector.extract_strided_slice %0 {offsets = [0, 0, 0, 0, 0], sizes = [1, 8, 1, 9, 8], strides = [1, 1, 1, 1, 1]} : vector<1x8x2x9x8xbf16> to vector<1x8x1x9x8xbf16>
    %3 = vector.shape_cast %2 : vector<1x8x1x9x8xbf16> to vector<1x8x9x8xbf16>
    %4 = vector.extract_strided_slice %0 {offsets = [0, 0, 1, 0, 0], sizes = [1, 8, 1, 9, 8], strides = [1, 1, 1, 1, 1]} : vector<1x8x2x9x8xbf16> to vector<1x8x1x9x8xbf16>
    %5 = vector.shape_cast %4 : vector<1x8x1x9x8xbf16> to vector<1x8x9x8xbf16>
    %6 = vector.extract_strided_slice %0 {offsets = [0, 1, 0, 0, 0], sizes = [1, 7, 1, 9, 8], strides = [1, 1, 1, 1, 1]} : vector<1x8x2x9x8xbf16> to vector<1x7x1x9x8xbf16>
    %7 = vector.shape_cast %6 : vector<1x7x1x9x8xbf16> to vector<1x7x9x8xbf16>
    %8 = vector.extract_strided_slice %1 {offsets = [0, 0, 0, 0, 0], sizes = [1, 1, 1, 9, 8], strides = [1, 1, 1, 1, 1]} : vector<1x1x2x9x8xbf16> to vector<1x1x1x9x8xbf16>
    %9 = vector.shape_cast %8 : vector<1x1x1x9x8xbf16> to vector<1x1x9x8xbf16>
    %10 = tpu.concatenate %7, %9 in 1 : vector<1x7x9x8xbf16>, vector<1x1x9x8xbf16> -> vector<1x8x9x8xbf16>
    %c0_9 = arith.constant 0 : index
    %c0_10 = arith.constant 0 : index
    %11 = vector.load %arg6[%c0_9, %c0_10] : memref<8x1xf32, #tpu.memory_space<vmem>>, vector<8x1xf32>
    %12 = vector.shape_cast %11 : vector<8x1xf32> to vector<8x1xf32>
    %13 = vector.broadcast %12 : vector<8x1xf32> to vector<8x64xf32>
    %14 = vector.extract_strided_slice %3 {offsets = [0, 0, 0, 0], sizes = [1, 8, 8, 8], strides = [1, 1, 1, 1]} : vector<1x8x9x8xbf16> to vector<1x8x8x8xbf16>
    %15 = vector.shape_cast %14 : vector<1x8x8x8xbf16> to vector<64x8xbf16>
    %c0_11 = arith.constant 0 : index
    %c0_12 = arith.constant 0 : index
    %c0_13 = arith.constant 0 : index
    %16 = vector.load %arg4[%c0_11, %c0_12, %c0_13] : memref<3x8x8xbf16, #tpu.memory_space<vmem>>, vector<1x8x8xbf16>
    %17 = vector.shape_cast %16 : vector<1x8x8xbf16> to vector<8x8xbf16>
    %cst = arith.constant dense<0.000000e+00> : vector<8x64xf32>
    %18 = tpu.matmul %17, %15, %cst {dimension_numbers = #tpu.dot_dimension_numbers<[1], [1], [0], [0], [0, 0, 1, 0], [], []>} : vector<8x8xbf16>, vector<64x8xbf16>, vector<8x64xf32> -> vector<8x64xf32>
    %19 = arith.addf %13, %18 : vector<8x64xf32>
    %20 = vector.extract_strided_slice %3 {offsets = [0, 0, 1, 0], sizes = [1, 8, 8, 4], strides = [1, 1, 1, 1]} : vector<1x8x9x8xbf16> to vector<1x8x8x4xbf16>
    %21 = vector.shape_cast %20 : vector<1x8x8x4xbf16> to vector<64x4xbf16>
    %c0_14 = arith.constant 0 : index
    %c0_15 = arith.constant 0 : index
    %c0_16 = arith.constant 0 : index
    %22 = vector.load %arg5[%c0_14, %c0_15, %c0_16] : memref<3x8x4xbf16, #tpu.memory_space<vmem>>, vector<1x8x4xbf16>
    %23 = vector.shape_cast %22 : vector<1x8x4xbf16> to vector<8x4xbf16>
    %cst_17 = arith.constant dense<0.000000e+00> : vector<8x64xf32>
    %24 = tpu.matmul %23, %21, %cst_17 {dimension_numbers = #tpu.dot_dimension_numbers<[1], [1], [0], [0], [0, 0, 1, 0], [], []>} : vector<8x4xbf16>, vector<64x4xbf16>, vector<8x64xf32> -> vector<8x64xf32>
    %25 = arith.addf %19, %24 : vector<8x64xf32>
    %26 = vector.extract_strided_slice %5 {offsets = [0, 0, 0, 0], sizes = [1, 8, 8, 8], strides = [1, 1, 1, 1]} : vector<1x8x9x8xbf16> to vector<1x8x8x8xbf16>
    %27 = vector.shape_cast %26 : vector<1x8x8x8xbf16> to vector<64x8xbf16>
    %c1 = arith.constant 1 : index
    %c0_18 = arith.constant 0 : index
    %c0_19 = arith.constant 0 : index
    %28 = vector.load %arg4[%c1, %c0_18, %c0_19] : memref<3x8x8xbf16, #tpu.memory_space<vmem>>, vector<1x8x8xbf16>
    %29 = vector.shape_cast %28 : vector<1x8x8xbf16> to vector<8x8xbf16>
    %cst_20 = arith.constant dense<0.000000e+00> : vector<8x64xf32>
    %30 = tpu.matmul %29, %27, %cst_20 {dimension_numbers = #tpu.dot_dimension_numbers<[1], [1], [0], [0], [0, 0, 1, 0], [], []>} : vector<8x8xbf16>, vector<64x8xbf16>, vector<8x64xf32> -> vector<8x64xf32>
    %31 = arith.addf %25, %30 : vector<8x64xf32>
    %32 = vector.extract_strided_slice %5 {offsets = [0, 0, 1, 0], sizes = [1, 8, 8, 4], strides = [1, 1, 1, 1]} : vector<1x8x9x8xbf16> to vector<1x8x8x4xbf16>
    %33 = vector.shape_cast %32 : vector<1x8x8x4xbf16> to vector<64x4xbf16>
    %c1_21 = arith.constant 1 : index
    %c0_22 = arith.constant 0 : index
    %c0_23 = arith.constant 0 : index
    %34 = vector.load %arg5[%c1_21, %c0_22, %c0_23] : memref<3x8x4xbf16, #tpu.memory_space<vmem>>, vector<1x8x4xbf16>
    %35 = vector.shape_cast %34 : vector<1x8x4xbf16> to vector<8x4xbf16>
    %cst_24 = arith.constant dense<0.000000e+00> : vector<8x64xf32>
    %36 = tpu.matmul %35, %33, %cst_24 {dimension_numbers = #tpu.dot_dimension_numbers<[1], [1], [0], [0], [0, 0, 1, 0], [], []>} : vector<8x4xbf16>, vector<64x4xbf16>, vector<8x64xf32> -> vector<8x64xf32>
    %37 = arith.addf %31, %36 : vector<8x64xf32>
    %38 = vector.extract_strided_slice %10 {offsets = [0, 0, 0, 0], sizes = [1, 8, 8, 8], strides = [1, 1, 1, 1]} : vector<1x8x9x8xbf16> to vector<1x8x8x8xbf16>
    %39 = vector.shape_cast %38 : vector<1x8x8x8xbf16> to vector<64x8xbf16>
    %c2 = arith.constant 2 : index
    %c0_25 = arith.constant 0 : index
    %c0_26 = arith.constant 0 : index
    %40 = vector.load %arg4[%c2, %c0_25, %c0_26] : memref<3x8x8xbf16, #tpu.memory_space<vmem>>, vector<1x8x8xbf16>
    %41 = vector.shape_cast %40 : vector<1x8x8xbf16> to vector<8x8xbf16>
    %cst_27 = arith.constant dense<0.000000e+00> : vector<8x64xf32>
    %42 = tpu.matmul %41, %39, %cst_27 {dimension_numbers = #tpu.dot_dimension_numbers<[1], [1], [0], [0], [0, 0, 1, 0], [], []>} : vector<8x8xbf16>, vector<64x8xbf16>, vector<8x64xf32> -> vector<8x64xf32>
    %43 = arith.addf %37, %42 : vector<8x64xf32>
    %44 = vector.extract_strided_slice %10 {offsets = [0, 0, 1, 0], sizes = [1, 8, 8, 4], strides = [1, 1, 1, 1]} : vector<1x8x9x8xbf16> to vector<1x8x8x4xbf16>
    %45 = vector.shape_cast %44 : vector<1x8x8x4xbf16> to vector<64x4xbf16>
    %c2_28 = arith.constant 2 : index
    %c0_29 = arith.constant 0 : index
    %c0_30 = arith.constant 0 : index
    %46 = vector.load %arg5[%c2_28, %c0_29, %c0_30] : memref<3x8x4xbf16, #tpu.memory_space<vmem>>, vector<1x8x4xbf16>
    %47 = vector.shape_cast %46 : vector<1x8x4xbf16> to vector<8x4xbf16>
    %cst_31 = arith.constant dense<0.000000e+00> : vector<8x64xf32>
    %48 = tpu.matmul %47, %45, %cst_31 {dimension_numbers = #tpu.dot_dimension_numbers<[1], [1], [0], [0], [0, 0, 1, 0], [], []>} : vector<8x4xbf16>, vector<64x4xbf16>, vector<8x64xf32> -> vector<8x64xf32>
    %49 = arith.addf %43, %48 : vector<8x64xf32>
    %c0_32 = arith.constant 0 : index
    %c0_33 = arith.constant 0 : index
    %c0_34 = arith.constant 0 : index
    %50 = vector.load %arg7[%c0_32, %c0_33, %c0_34] : memref<1x8x64xf32, #tpu.memory_space<vmem>>, vector<1x8x64xf32>
    %51 = vector.shape_cast %50 : vector<1x8x64xf32> to vector<8x64xf32>
    %52 = vector.shape_cast %49 : vector<8x64xf32> to vector<1x8x64xf32>
    tpu.vector_store %arg7[%c0_32, %c0_33, %c0_34], %52 {strides = array<i32>} : memref<1x8x64xf32, #tpu.memory_space<vmem>>, vector<1x8x64xf32>,
    return
  }
  func.func @transform_0(%arg0: i32, %arg1: i32) -> (i32, i32, i32, i32, i32) {
    %c0_i32 = arith.constant 0 : i32
    %c0_i32_0 = arith.constant 0 : i32
    %c0_i32_1 = arith.constant 0 : i32
    %c0_i32_2 = arith.constant 0 : i32
    return %arg0, %arg1, %c0_i32, %c0_i32_0, %c0_i32_1 : i32, i32, i32, i32, i32
  }
  func.func @transform_1(%arg0: i32, %arg1: i32) -> (i32, i32, i32, i32, i32) {
    %c1_i32 = arith.constant 1 : i32
    %0 = arith.addi %arg1, %c1_i32 : i32
    %c8_i32 = arith.constant 8 : i32
    %1 = arith.muli %c8_i32, %0 : i32
    %c0_i32 = arith.constant 0 : i32
    %c0_i32_0 = arith.constant 0 : i32
    %c0_i32_1 = arith.constant 0 : i32
    %c0_i32_2 = arith.constant 0 : i32
    return %arg0, %1, %c0_i32, %c0_i32_0, %c0_i32_1 : i32, i32, i32, i32, i32
  }
  func.func @transform_2(%arg0: i32, %arg1: i32) -> (i32, i32, i32) {
    %c0_i32 = arith.constant 0 : i32
    %c0_i32_0 = arith.constant 0 : i32
    %c0_i32_1 = arith.constant 0 : i32
    %c0_i32_2 = arith.constant 0 : i32
    return %c0_i32, %c0_i32_0, %c0_i32_1 : i32, i32, i32
  }
  func.func @transform_3(%arg0: i32, %arg1: i32) -> (i32, i32, i32) {
    %c0_i32 = arith.constant 0 : i32
    %c0_i32_0 = arith.constant 0 : i32
    %c0_i32_1 = arith.constant 0 : i32
    %c0_i32_2 = arith.constant 0 : i32
    return %c0_i32, %c0_i32_0, %c0_i32_1 : i32, i32, i32
  }
  func.func @transform_4(%arg0: i32, %arg1: i32) -> (i32, i32) {
    %c0_i32 = arith.constant 0 : i32
    %c0_i32_0 = arith.constant 0 : i32
    %c0_i32_1 = arith.constant 0 : i32
    return %c0_i32, %c0_i32_0 : i32, i32
  }
  func.func @transform_5(%arg0: i32, %arg1: i32) -> (i32, i32, i32) {
    %c0_i32 = arith.constant 0 : i32
    %c0_i32_0 = arith.constant 0 : i32
    return %arg0, %c0_i32, %arg1 : i32, i32, i32
  }
}

</mosaic_0001>

<llo_original>
// kernel: downsample_forward.1
$region0: #{downsample_forward.1}
  #allocation0 [shape = 'u32[]', space=smem, size = 0x4, offset = 0x4, fixed_abs, tag = 'smem constant byte address 0x4 - core index']
  #allocation1 [shape = 'u32[144,128]{1,0:T(1,128)}', space=vmem, size = 0x12000, scoped, tag = 'internal scratch']
  %s0 = inlined_call_operand.vmem [shape: bf16[2,9,2,9,8], index: 0, kind: input, shape index: {}, may-alias: {0,1}]
  %s1 = inlined_call_operand.vmem [shape: bf16[2,9,2,9,8], index: 1, kind: input, shape index: {}, may-alias: {0,1}]
  %s2 = inlined_call_operand.vmem [shape: bf16[3,8,8], index: 2, kind: input, shape index: {}]
  %s3 = inlined_call_operand.vmem [shape: bf16[3,8,4], index: 3, kind: input, shape index: {}]
  %s4 = inlined_call_operand.vmem [shape: f32[8,1], index: 4, kind: input, shape index: {}]
  %s5 = inlined_call_operand.vmem [shape: f32[2,8,64], index: 5, kind: output, shape index: {}]
  %s6 = sld [smem:[#allocation0]]
  $region53: #{downsample_forward.1} parent=0
    _
  %s8 = ssub.s32 1, %s6
  %s9 = scalar_select 0, %s8, %s6
  loop: start=0, step=1, limit=4
  $region2: #{downsample_forward.1} parent=0 // loop_pre_header
    _
  $region3: #{downsample_forward.1} parent=0 // loop_header
    %s11 = sphi 0, %s15
    %p12 = scmp.ge.s32.totalorder %s11, 4
    %s18 = sphi 0, %s30
    %s19 = sphi 0, %s26
    %s20 = sphi 0, %s18
    %s21 = sphi 0, %s19
    %s22 = sphi 0, %s20
    %s23 = sphi 0, %s21
    %s35 = sphi 0, %s37
    %s38 = sphi 0, %s35
    %s39 = sphi 0, %s38
    %s55 = sphi 0, %s39
    %s67 = sphi 0, %s69
    %s70 = sphi 0, %s67
    %s71 = sphi 0, %s70
    %s87 = sphi 0, %s71
    %s91 = sphi 0, %s91
    %s93 = sphi 0, %s91
    %s94 = sphi 0, %s93
    %s108 = sphi 0, %s94
    %s112 = sphi 0, %s112
    %s114 = sphi 0, %s112
    %s115 = sphi 0, %s114
    %s129 = sphi 0, %s115
    %s133 = sphi 0, %s133
    %s135 = sphi 0, %s133
    %s136 = sphi 0, %s135
    %s150 = sphi 0, %s136
    %s158 = sphi 0, %s160
    %s161 = sphi 0, %s158
    %s162 = sphi 0, %s161
    %s178 = sphi 0, %s162
  $region4: #{downsample_forward.1} parent=0 // loop_header_branch
    %14 = sbr.rel (%p12) target = $region8
  $region5: #{downsample_forward.1} parent=0 // loop_body
    %s16 = ssub.s32 %s11, 1
    %s17 = ssub.s32 %s11, 2
    %s24 = sadd.s32 1, %s19
    %p25 = scmp.ge.s32.totalorder %s24, 1
    %s26 = scalar_select %p25, 0, %s24
    %s27 = sadd.s32 1, %s18
    %s28 = scalar_select %p25, %s27, %s18
    %p29 = scmp.ge.s32.totalorder %s28, 2
    %s30 = scalar_select %p29, 0, %s28
    %s31 = ssub.s32 %s18, %s30
    %s32 = ssub.s32 %s19, %s26
    %s33 = sor.u32 %s31, %s32
    %p34 = scmp.eq.s32.totalorder %s33, 0
    %s36 = sadd.s32 %s35, 1
    %s37 = scalar_select %p34, %s35, %s36
    %p40 = pneg %p34
    %p41 = scmp.eq.s32.totalorder %s11, 1
    %p42 = por %p40, %p41
    %p43 = scmp.ne.s32.totalorder %s35, %s38
    %p44 = scmp.eq.s32.totalorder %s11, 0
    %p45 = por %p43, %p44
    %p46 = scmp.ne.s32.totalorder %s35, %s38
    %p47 = scmp.eq.s32.totalorder %s16, 1
    %p48 = por %p46, %p47
    %p49 = scmp.ne.s32.totalorder %s38, %s39
    %p50 = scmp.eq.s32.totalorder %s16, 0
    %p51 = por %p49, %p50
    %p52 = scmp.ne.s32.totalorder %s38, %s39
    %p53 = scmp.eq.s32.totalorder %s17, 1
    %p54 = por %p52, %p53
    %p56 = scmp.ne.s32.totalorder %s39, %s55
    %p57 = scmp.eq.s32.totalorder %s17, 0
    %p58 = por %p56, %p57
    %s59 = sadd.s32 %s19, 1
    %s60 = smul.u32 %s59, 8
    %s61 = sadd.s32 %s26, 1
    %s62 = smul.u32 %s61, 8
    %s63 = ssub.s32 %s18, %s30
    %s64 = ssub.s32 %s60, %s62
    %s65 = sor.u32 %s63, %s64
    %p66 = scmp.eq.s32.totalorder %s65, 0
    %s68 = sadd.s32 %s67, 1
    %s69 = scalar_select %p66, %s67, %s68
    %p72 = pneg %p66
    %p73 = scmp.eq.s32.totalorder %s11, 1
    %p74 = por %p72, %p73
    %p75 = scmp.ne.s32.totalorder %s67, %s70
    %p76 = scmp.eq.s32.totalorder %s11, 0
    %p77 = por %p75, %p76
    %p78 = scmp.ne.s32.totalorder %s67, %s70
    %p79 = scmp.eq.s32.totalorder %s16, 1
    %p80 = por %p78, %p79
    %p81 = scmp.ne.s32.totalorder %s70, %s71
    %p82 = scmp.eq.s32.totalorder %s16, 0
    %p83 = por %p81, %p82
    %p84 = scmp.ne.s32.totalorder %s70, %s71
    %p85 = scmp.eq.s32.totalorder %s17, 1
    %p86 = por %p84, %p85
    %p88 = scmp.ne.s32.totalorder %s71, %s87
    %p89 = scmp.eq.s32.totalorder %s17, 0
    %p90 = por %p88, %p89
    %s92 = sadd.s32 %s91, 1
    %p95 = scmp.eq.s32.totalorder %s11, 1
    %p96 = scmp.ne.s32.totalorder %s91, %s93
    %p97 = scmp.eq.s32.totalorder %s11, 0
    %p98 = por %p96, %p97
    %p99 = scmp.ne.s32.totalorder %s91, %s93
    %p100 = scmp.eq.s32.totalorder %s16, 1
    %p101 = por %p99, %p100
    %p102 = scmp.ne.s32.totalorder %s93, %s94
    %p103 = scmp.eq.s32.totalorder %s16, 0
    %p104 = por %p102, %p103
    %p105 = scmp.ne.s32.totalorder %s93, %s94
    %p106 = scmp.eq.s32.totalorder %s17, 1
    %p107 = por %p105, %p106
    %p109 = scmp.ne.s32.totalorder %s94, %s108
    %p110 = scmp.eq.s32.totalorder %s17, 0
    %p111 = por %p109, %p110
    %s113 = sadd.s32 %s112, 1
    %p116 = scmp.eq.s32.totalorder %s11, 1
    %p117 = scmp.ne.s32.totalorder %s112, %s114
    %p118 = scmp.eq.s32.totalorder %s11, 0
    %p119 = por %p117, %p118
    %p120 = scmp.ne.s32.totalorder %s112, %s114
    %p121 = scmp.eq.s32.totalorder %s16, 1
    %p122 = por %p120, %p121
    %p123 = scmp.ne.s32.totalorder %s114, %s115
    %p124 = scmp.eq.s32.totalorder %s16, 0
    %p125 = por %p123, %p124
    %p126 = scmp.ne.s32.totalorder %s114, %s115
    %p127 = scmp.eq.s32.totalorder %s17, 1
    %p128 = por %p126, %p127
    %p130 = scmp.ne.s32.totalorder %s115, %s129
    %p131 = scmp.eq.s32.totalorder %s17, 0
    %p132 = por %p130, %p131
    %s134 = sadd.s32 %s133, 1
    %p137 = scmp.eq.s32.totalorder %s11, 1
    %p138 = scmp.ne.s32.totalorder %s133, %s135
    %p139 = scmp.eq.s32.totalorder %s11, 0
    %p140 = por %p138, %p139
    %p141 = scmp.ne.s32.totalorder %s133, %s135
    %p142 = scmp.eq.s32.totalorder %s16, 1
    %p143 = por %p141, %p142
    %p144 = scmp.ne.s32.totalorder %s135, %s136
    %p145 = scmp.eq.s32.totalorder %s16, 0
    %p146 = por %p144, %p145
    %p147 = scmp.ne.s32.totalorder %s135, %s136
    %p148 = scmp.eq.s32.totalorder %s17, 1
    %p149 = por %p147, %p148
    %p151 = scmp.ne.s32.totalorder %s136, %s150
    %p152 = scmp.eq.s32.totalorder %s17, 0
    %p153 = por %p151, %p152
    %s154 = ssub.s32 %s18, %s30
    %s155 = ssub.s32 %s19, %s26
    %s156 = sor.u32 %s154, %s155
    %p157 = scmp.eq.s32.totalorder %s156, 0
    %s159 = sadd.s32 %s158, 1
    %s160 = scalar_select %p157, %s158, %s159
    %p163 = pneg %p157
    %p164 = scmp.eq.s32.totalorder %s11, 1
    %p165 = por %p163, %p164
    %p166 = scmp.ne.s32.totalorder %s158, %s161
    %p167 = scmp.eq.s32.totalorder %s11, 0
    %p168 = por %p166, %p167
    %p169 = scmp.ne.s32.totalorder %s158, %s161
    %p170 = scmp.eq.s32.totalorder %s16, 1
    %p171 = por %p169, %p170
    %p172 = scmp.ne.s32.totalorder %s161, %s162
    %p173 = scmp.eq.s32.totalorder %s16, 0
    %p174 = por %p172, %p173
    %p175 = scmp.ne.s32.totalorder %s161, %s162
    %p176 = scmp.eq.s32.totalorder %s17, 1
    %p177 = por %p175, %p176
    %p179 = scmp.ne.s32.totalorder %s162, %s178
    %p180 = scmp.eq.s32.totalorder %s17, 0
    %p181 = por %p179, %p180
    %p182 = scmp.le.s32.totalorder 1, %s11
    %p183 = scmp.lt.s32.totalorder %s11, 3
    %p184 = pnand %p182, %p183
    %p185 = pneg %p184
    // Predicated region
    $region9: #{downsample_forward.1} parent=5 // pred_check
      _
    $region10: #{downsample_forward.1} parent=5 // pred_check_branch
      %187 = sbr.rel (%p184) target = $region12
    $region11: #{downsample_forward.1} parent=5 // pred_region
      %s188 = ssub.s32 %s11, 1
      // Predicated region
      $region13: #{downsample_forward.1} parent=11 // pred_check
        %p189 = pneg %p104
      $region14: #{downsample_forward.1} parent=11 // pred_check_branch
        %191 = sbr.rel (%p189) target = $region16
      $region15: #{downsample_forward.1} parent=11 // pred_region
        _
      $region16: #{downsample_forward.1} parent=11 // pred_fallthru
        _
      // Predicated region
      $region17: #{downsample_forward.1} parent=11 // pred_check
        %p192 = pneg %p125
      $region18: #{downsample_forward.1} parent=11 // pred_check_branch
        %194 = sbr.rel (%p192) target = $region20
      $region19: #{downsample_forward.1} parent=11 // pred_region
        _
      $region20: #{downsample_forward.1} parent=11 // pred_fallthru
        _
      // Predicated region
      $region21: #{downsample_forward.1} parent=11 // pred_check
        %p195 = pneg %p146
      $region22: #{downsample_forward.1} parent=11 // pred_check_branch
        %197 = sbr.rel (%p195) target = $region24
      $region23: #{downsample_forward.1} parent=11 // pred_region
        _
      $region24: #{downsample_forward.1} parent=11 // pred_fallthru
        _
    $region12: #{downsample_forward.1} parent=5 // pred_fallthru
      _
    %p198 = scmp.lt.s32.totalorder %s11, 2
    // Predicated region
    $region25: #{downsample_forward.1} parent=5 // pred_check
      %p199 = pneg %p198
    $region26: #{downsample_forward.1} parent=5 // pred_check_branch
      %201 = sbr.rel (%p199) target = $region28
    $region27: #{downsample_forward.1} parent=5 // pred_region
      // Predicated region
      $region29: #{downsample_forward.1} parent=27 // pred_check
        %p202 = pneg %p45
      $region30: #{downsample_forward.1} parent=27 // pred_check_branch
        %204 = sbr.rel (%p202) target = $region32
      $region31: #{downsample_forward.1} parent=27 // pred_region
        %s205 = smul.u32 8, %s19
        %s206 = ssub.s32 9, %s205
        %p207 = scmp.lt.s32.totalorder %s206, 8
        %s208 = scalar_select %p207, %s206, 8
        %s209 = smul.u32 64, %s208
        %s210 = smul.u32 %s209, 2
        %s211 = smul.u32 %s210, 2
        %p212 = scmp.lt.s32.totalorder %s18, 1
        %s213 = scalar_select %p212, %s18, 1
        %p214 = scmp.lt.s32.totalorder %s205, 8
        %s215 = scalar_select %p214, %s205, 8
        %s216 = smul.addr %s215, 4
        %s217 = smul.addr %s213, 36
        %s218 = sadd.s32 %s216, %s217
        %s219 = smul.addr %s218, 4
        %s220 = scalar_lea.vmem %s0, %s219
        %s221 = smul.u32 8, %s19
        %s222 = ssub.s32 9, %s221
        %p223 = scmp.lt.s32.totalorder %s222, 8
        %s224 = scalar_select %p223, %s222, 8
        %s225 = smul.u32 64, %s224
        %s226 = smul.u32 %s225, 2
        %s227 = smul.u32 %s226, 2
      $region32: #{downsample_forward.1} parent=27 // pred_fallthru
        _
      // Predicated region
      $region33: #{downsample_forward.1} parent=27 // pred_check
        %p228 = pneg %p77
      $region34: #{downsample_forward.1} parent=27 // pred_check_branch
        %230 = sbr.rel (%p228) target = $region36
      $region35: #{downsample_forward.1} parent=27 // pred_region
        %s231 = sadd.s32 %s19, 1
        %s232 = smul.u32 %s231, 8
        %p233 = scmp.lt.s32.totalorder %s18, 1
        %s234 = scalar_select %p233, %s18, 1
        %p235 = scmp.lt.s32.totalorder %s232, 8
        %s236 = scalar_select %p235, %s232, 8
        %s237 = smul.addr %s236, 4
        %s238 = smul.addr %s234, 36
        %s239 = sadd.s32 %s237, %s238
        %s240 = smul.addr %s239, 4
        %s241 = scalar_lea.vmem %s1, %s240
        %s242 = sadd.s32 %s19, 1
        %s243 = smul.u32 %s242, 8
      $region36: #{downsample_forward.1} parent=27 // pred_fallthru
        _
    $region28: #{downsample_forward.1} parent=5 // pred_fallthru
      _
    %p244 = scmp.le.s32.totalorder 1, %s11
    %p245 = scmp.lt.s32.totalorder %s11, 3
    %p246 = pnand %p244, %p245
    %p247 = pneg %p246
    // Predicated region
    $region37: #{downsample_forward.1} parent=5 // pred_check
      _
    $region38: #{downsample_forward.1} parent=5 // pred_check_branch
      %249 = sbr.rel (%p246) target = $region40
    $region39: #{downsample_forward.1} parent=5 // pred_region
      %s250 = ssub.s32 %s11, 1
      %s251 = smul.u32 8, %s21
      %s252 = ssub.s32 9, %s251
      %p253 = scmp.lt.s32.totalorder %s252, 8
      %s254 = scalar_select %p253, %s252, 8
      %s255 = smul.u32 64, %s254
      %s256 = smul.u32 %s255, 2
      %s257 = smul.u32 %s256, 2
      %p258 = scmp.lt.s32.totalorder %s20, 1
      %s259 = scalar_select %p258, %s20, 1
      %p260 = scmp.lt.s32.totalorder %s251, 8
      %s261 = scalar_select %p260, %s251, 8
      %s262 = smul.addr %s261, 4
      %s263 = smul.addr %s259, 36
      %s264 = sadd.s32 %s262, %s263
      %s265 = smul.addr %s264, 4
      %s266 = scalar_lea.vmem %s0, %s265
      %p267 = pneg %p51
      %p268 = pneg %p48
      %s269 = sadd.s32 %s21, 1
      %s270 = smul.u32 %s269, 8
      %p271 = scmp.lt.s32.totalorder %s20, 1
      %s272 = scalar_select %p271, %s20, 1
      %p273 = scmp.lt.s32.totalorder %s270, 8
      %s274 = scalar_select %p273, %s270, 8
      %s275 = smul.addr %s274, 4
      %s276 = smul.addr %s272, 36
      %s277 = sadd.s32 %s275, %s276
      %s278 = smul.addr %s277, 4
      %s279 = scalar_lea.vmem %s1, %s278
      %p280 = pneg %p83
      %p281 = pneg %p80
      %p282 = pneg %p104
      %p283 = pneg %p101
      %p284 = pneg %p125
      %p285 = pneg %p122
      %p286 = pneg %p146
      %p287 = pneg %p143
      %p288 = pneg %p174
      %p289 = pneg %p171
      %p290 = scmp.lt.s32.totalorder %s20, 1
      %s291 = scalar_select %p290, %s20, 1
      %p292 = scmp.lt.s32.totalorder %s21, 0
      %s293 = scalar_select %p292, %s21, 0
      %s294 = sadd.s32 %s293, %s291
      %s295 = smul.addr %s294, 8
      %s296 = scalar_lea.vmem %s5, %s295
      %s297 = smul.u32 8, %s21
      %s298 = ssub.s32 9, %s297
      %p299 = scmp.lt.s32.totalorder %s298, 8
      %s300 = scalar_select %p299, %s298, 8
      %s301 = smul.u32 64, %s300
      %s302 = smul.u32 %s301, 2
      %s303 = smul.u32 %s302, 2
      %p304 = scmp.lt.s32.totalorder %s20, 1
      %s305 = scalar_select %p304, %s20, 1
      %p306 = scmp.lt.s32.totalorder %s297, 8
      %s307 = scalar_select %p306, %s297, 8
      %s308 = smul.addr %s307, 4
      %s309 = smul.addr %s305, 36
      %s310 = sadd.s32 %s308, %s309
      %s311 = smul.addr %s310, 4
      %s312 = scalar_lea.vmem %s0, %s311
      %s313 = smul.u32 8, %s21
      %s314 = ssub.s32 9, %s313
      %p315 = scmp.lt.s32.totalorder %s314, 8
      %s316 = scalar_select %p315, %s314, 8
      %s317 = smul.u32 64, %s316
      %s318 = smul.u32 %s317, 2
      %s319 = smul.u32 %s318, 2
      %s320 = sadd.s32 %s21, 1
      %s321 = smul.u32 %s320, 8
      %p322 = scmp.lt.s32.totalorder %s20, 1
      %s323 = scalar_select %p322, %s20, 1
      %p324 = scmp.lt.s32.totalorder %s321, 8
      %s325 = scalar_select %p324, %s321, 8
      %s326 = smul.addr %s325, 4
      %s327 = smul.addr %s323, 36
      %s328 = sadd.s32 %s326, %s327
      %s329 = smul.addr %s328, 4
      %s330 = scalar_lea.vmem %s1, %s329
      %s331 = sadd.s32 %s21, 1
      %s332 = smul.u32 %s331, 8
      %p333 = scmp.lt.s32.totalorder %s20, 1
      %s334 = scalar_select %p333, %s20, 1
      %p335 = scmp.lt.s32.totalorder %s21, 0
      %s336 = scalar_select %p335, %s21, 0
      %s337 = sadd.s32 %s336, %s334
      %s338 = smul.addr %s337, 8
      %s339 = scalar_lea.vmem %s5, %s338
      %v341 = vld [vmem:[%s312] sm:$0xf]
      %v342 = vld [vmem:[%s312 + $0x4] sm:$0x1]
      %v343 = vld [vmem:[%s312 + $0x8] sm:$0xf]
      %v344 = vld [vmem:[%s312 + $0xc] sm:$0x1]
      %v345 = vld [vmem:[%s312 + $0x10] sm:$0xf]
      %v346 = vld [vmem:[%s312 + $0x14] sm:$0x1]
      %v347 = vld [vmem:[%s312 + $0x18] sm:$0xf]
      %v348 = vld [vmem:[%s312 + $0x1c] sm:$0x1]
      %v349 = vld [vmem:[%s312 + $0x20] sm:$0xf]
      %v350 = vld [vmem:[%s312 + $0x24] sm:$0x1]
      %v351 = vld [vmem:[%s312 + $0x28] sm:$0xf]
      %v352 = vld [vmem:[%s312 + $0x2c] sm:$0x1]
      %v353 = vld [vmem:[%s312 + $0x30] sm:$0xf]
      %v354 = vld [vmem:[%s312 + $0x34] sm:$0x1]
      %v355 = vld [vmem:[%s312 + $0x38] sm:$0xf]
      %v356 = vld [vmem:[%s312 + $0x3c] sm:$0x1]
      %v357 = vld [vmem:[%s312 + $0x40] sm:$0xf]
      %v358 = vld [vmem:[%s312 + $0x44] sm:$0x1]
      %v359 = vld [vmem:[%s312 + $0x48] sm:$0xf]
      %v360 = vld [vmem:[%s312 + $0x4c] sm:$0x1]
      %v361 = vld [vmem:[%s312 + $0x50] sm:$0xf]
      %v362 = vld [vmem:[%s312 + $0x54] sm:$0x1]
      %v363 = vld [vmem:[%s312 + $0x58] sm:$0xf]
      %v364 = vld [vmem:[%s312 + $0x5c] sm:$0x1]
      %v365 = vld [vmem:[%s312 + $0x60] sm:$0xf]
      %v366 = vld [vmem:[%s312 + $0x64] sm:$0x1]
      %v367 = vld [vmem:[%s312 + $0x68] sm:$0xf]
      %v368 = vld [vmem:[%s312 + $0x6c] sm:$0x1]
      %v369 = vld [vmem:[%s312 + $0x70] sm:$0xf]
      %v370 = vld [vmem:[%s312 + $0x74] sm:$0x1]
      %v371 = vld [vmem:[%s312 + $0x78] sm:$0xf]
      %v372 = vld [vmem:[%s312 + $0x7c] sm:$0x1]
      %v373 = vld [vmem:[%s330] sm:$0xf]
      %v374 = vld [vmem:[%s330 + $0x4] sm:$0x1]
      %v375 = vld [vmem:[%s4] sm:$0xff]
      %377 = vset.pattern.permute.xlu0 0
      %378 = vperm.xlu0 %377, %v375
      %v379 = vpop.permute.xlu0 %378
      %v381 = vld [vmem:[%s2] sm:$0xf]
      %v390 = vunpack.c.l.b16 %v341
      %v391 = vunpack.c.l.b16 %v345
      %v392 = vunpack.c.l.b16 %v349
      %v393 = vunpack.c.l.b16 %v353
      %v394 = vunpack.c.l.b16 %v357
      %v395 = vunpack.c.l.b16 %v361
      %v396 = vunpack.c.l.b16 %v365
      %v397 = vunpack.c.l.b16 %v369
      %v398 = vpack.c.b16 %v391, %v390
      %v399 = vpack.c.b16 %v393, %v392
      %v400 = vpack.c.b16 %v395, %v394
      %v401 = vpack.c.b16 %v397, %v396
      %vm402 = vcmask 64512
      %v404 = vsel %vm402, %v381, 0
      %v407 = vsel %vm402, %v398, 0
      %v410 = vsel %vm402, %v399, 0
      %v413 = vsel %vm402, %v400, 0
      %v416 = vsel %vm402, %v401, 0
      %418 = vmatprep.subr.bf16.mxu0 0
      %419 = vmatpush1.bf16.xpose.msra.mxu0 0
      %420 = vmatprep.subr.bf16.mxu0 0
      %421 = vmatpush1.bf16.xpose.msra.mxu0 0
      %422 = vmatprep.subr.bf16.mxu0 0
      %423 = vmatpush1.bf16.xpose.msra.mxu0 0
      %424 = vmatprep.subr.bf16.mxu0 0
      %425 = vmatpush1.bf16.xpose.msra.mxu0 0
      %426 = vmatprep.subr.bf16.mxu0 0
      %427 = vmatpush1.bf16.xpose.msra.mxu0 %v416
      %428 = vmatprep.subr.bf16.mxu0 0
      %429 = vmatpush1.bf16.xpose.msra.mxu0 %v413
      %430 = vmatprep.subr.bf16.mxu0 0
      %431 = vmatpush1.bf16.xpose.msra.mxu0 %v410
      %432 = vmatprep.subr.bf16.mxu0 0
      %433 = vmatpush1.bf16.xpose.msra.mxu0 %v407
      %434 = vmatprep.subr.bf16.mxu0 0
      %435 = vmatpush2.bf16.xpose.msra.mxu0 0
      %436 = vmatprep.subr.bf16.mxu0 0
      %437 = vmatpush2.bf16.xpose.msra.mxu0 0
      %438 = vmatprep.subr.bf16.mxu0 0
      %439 = vmatpush2.bf16.xpose.msra.mxu0 0
      %440 = vmatprep.subr.bf16.mxu0 0
      %441 = vmatpush2.bf16.xpose.msra.mxu0 0
      %442 = vmatprep.subr.bf16.mxu0 0
      %443 = vmatpush2.bf16.xpose.msra.mxu0 0
      %444 = vmatprep.subr.bf16.mxu0 0
      %445 = vmatpush2.bf16.xpose.msra.mxu0 0
      %446 = vmatprep.subr.bf16.mxu0 0
      %447 = vmatpush2.bf16.xpose.msra.mxu0 0
      %448 = vmatprep.subr.bf16.mxu0 0
      %449 = vmatpush2.bf16.xpose.msra.mxu0 0
      %450 = vmatprep.mubr.bf16.mxu0 0
      %451 = vmatmul.mubr.bf16.gmra.mxu0 %v404
      %v452 = vpop.f32.mrf.mxu0
      %v453 = vadd.f32 0.0, %v452
      %v454 = vpop.f32.mrf.mxu0
      %v455 = vpop.f32.mrf.mxu0
      %v456 = vpop.f32.mrf.mxu0
      %457 = vdwg.mxu0
      %v458 = vadd.f32 %v379, %v453
      %vm459 = vsmask.f32 3328
      %vm460 = vsmask.f32 7440
      %vm461 = vmor %vm459, %vm460
      %v463 = vshrl.u32 %v341, 16
      %v465 = vrot.slane %v463, 4
      %v466 = vshll.u32 %v341, 16
      %v468 = vrot.slane %v466, 5
      %v469 = vor.u32 %v465, %v468
      %v470 = vrot.slane %v469, 4
      %v472 = vshll.u32 %v342, 16
      %v474 = vrot.slane %v472, 5
      %v475 = vsel %vm461, %v470, %v474
      %v477 = vshrl.u32 %v345, 16
      %v479 = vrot.slane %v477, 4
      %v480 = vshll.u32 %v345, 16
      %v482 = vrot.slane %v480, 5
      %v483 = vor.u32 %v479, %v482
      %v484 = vrot.slane %v483, 4
      %v486 = vshll.u32 %v346, 16
      %v488 = vrot.slane %v486, 5
      %v489 = vsel %vm461, %v484, %v488
      %v491 = vshrl.u32 %v349, 16
      %v493 = vrot.slane %v491, 4
      %v494 = vshll.u32 %v349, 16
      %v496 = vrot.slane %v494, 5
      %v497 = vor.u32 %v493, %v496
      %v498 = vrot.slane %v497, 4
      %v500 = vshll.u32 %v350, 16
      %v502 = vrot.slane %v500, 5
      %v503 = vsel %vm461, %v498, %v502
      %v505 = vshrl.u32 %v353, 16
      %v507 = vrot.slane %v505, 4
      %v508 = vshll.u32 %v353, 16
      %v510 = vrot.slane %v508, 5
      %v511 = vor.u32 %v507, %v510
      %v512 = vrot.slane %v511, 4
      %v514 = vshll.u32 %v354, 16
      %v516 = vrot.slane %v514, 5
      %v517 = vsel %vm461, %v512, %v516
      %v519 = vshrl.u32 %v357, 16
      %v521 = vrot.slane %v519, 4
      %v522 = vshll.u32 %v357, 16
      %v524 = vrot.slane %v522, 5
      %v525 = vor.u32 %v521, %v524
      %v526 = vrot.slane %v525, 4
      %v528 = vshll.u32 %v358, 16
      %v530 = vrot.slane %v528, 5
      %v531 = vsel %vm461, %v526, %v530
      %v533 = vshrl.u32 %v361, 16
      %v535 = vrot.slane %v533, 4
      %v536 = vshll.u32 %v361, 16
      %v538 = vrot.slane %v536, 5
      %v539 = vor.u32 %v535, %v538
      %v540 = vrot.slane %v539, 4
      %v542 = vshll.u32 %v362, 16
      %v544 = vrot.slane %v542, 5
      %v545 = vsel %vm461, %v540, %v544
      %v547 = vshrl.u32 %v365, 16
      %v549 = vrot.slane %v547, 4
      %v550 = vshll.u32 %v365, 16
      %v552 = vrot.slane %v550, 5
      %v553 = vor.u32 %v549, %v552
      %v554 = vrot.slane %v553, 4
      %v556 = vshll.u32 %v366, 16
      %v558 = vrot.slane %v556, 5
      %v559 = vsel %vm461, %v554, %v558
      %v561 = vshrl.u32 %v369, 16
      %v563 = vrot.slane %v561, 4
      %v564 = vshll.u32 %v369, 16
      %v566 = vrot.slane %v564, 5
      %v567 = vor.u32 %v563, %v566
      %v568 = vrot.slane %v567, 4
      %v570 = vshll.u32 %v370, 16
      %v572 = vrot.slane %v570, 5
      %v573 = vsel %vm461, %v568, %v572
      %v574 = vld [vmem:[%s3] sm:$0xf]
      %v575 = vunpack.c.l.b16 %v475
      %v576 = vunpack.c.l.b16 %v489
      %v577 = vunpack.c.l.b16 %v503
      %v578 = vunpack.c.l.b16 %v517
      %v579 = vunpack.c.l.b16 %v531
      %v580 = vunpack.c.l.b16 %v545
      %v581 = vunpack.c.l.b16 %v559
      %v582 = vunpack.c.l.b16 %v573
      %v583 = vpack.c.b16 %v576, %v575
      %v584 = vpack.c.b16 %v578, %v577
      %v585 = vpack.c.b16 %v580, %v579
      %v586 = vpack.c.b16 %v582, %v581
      %vm587 = vcmask 31744
      %v589 = vsel %vm587, %v574, 0
      %v592 = vsel %vm587, %v583, 0
      %v595 = vsel %vm587, %v584, 0
      %v598 = vsel %vm587, %v585, 0
      %v601 = vsel %vm587, %v586, 0
      %603 = vmatprep.subr.bf16.mxu0 0
      %604 = vmatpush1.bf16.xpose.msra.mxu0 0
      %605 = vmatprep.subr.bf16.mxu0 0
      %606 = vmatpush1.bf16.xpose.msra.mxu0 0
      %607 = vmatprep.subr.bf16.mxu0 0
      %608 = vmatpush1.bf16.xpose.msra.mxu0 0
      %609 = vmatprep.subr.bf16.mxu0 0
      %610 = vmatpush1.bf16.xpose.msra.mxu0 0
      %611 = vmatprep.subr.bf16.mxu0 0
      %612 = vmatpush1.bf16.xpose.msra.mxu0 %v601
      %613 = vmatprep.subr.bf16.mxu0 0
      %614 = vmatpush1.bf16.xpose.msra.mxu0 %v598
      %615 = vmatprep.subr.bf16.mxu0 0
      %616 = vmatpush1.bf16.xpose.msra.mxu0 %v595
      %617 = vmatprep.subr.bf16.mxu0 0
      %618 = vmatpush1.bf16.xpose.msra.mxu0 %v592
      %619 = vmatprep.subr.bf16.mxu0 0
      %620 = vmatpush2.bf16.xpose.msra.mxu0 0
      %621 = vmatprep.subr.bf16.mxu0 0
      %622 = vmatpush2.bf16.xpose.msra.mxu0 0
      %623 = vmatprep.subr.bf16.mxu0 0
      %624 = vmatpush2.bf16.xpose.msra.mxu0 0
      %625 = vmatprep.subr.bf16.mxu0 0
      %626 = vmatpush2.bf16.xpose.msra.mxu0 0
      %627 = vmatprep.subr.bf16.mxu0 0
      %628 = vmatpush2.bf16.xpose.msra.mxu0 0
      %629 = vmatprep.subr.bf16.mxu0 0
      %630 = vmatpush2.bf16.xpose.msra.mxu0 0
      %631 = vmatprep.subr.bf16.mxu0 0
      %632 = vmatpush2.bf16.xpose.msra.mxu0 0
      %633 = vmatprep.subr.bf16.mxu0 0
      %634 = vmatpush2.bf16.xpose.msra.mxu0 0
      %635 = vmatprep.mubr.bf16.mxu0 0
      %636 = vmatmul.mubr.bf16.gmra.mxu0 %v589
      %v637 = vpop.f32.mrf.mxu0
      %v638 = vadd.f32 0.0, %v637
      %v639 = vpop.f32.mrf.mxu0
      %v640 = vpop.f32.mrf.mxu0
      %v641 = vpop.f32.mrf.mxu0
      %642 = vdwg.mxu0
      %v643 = vadd.f32 %v458, %v638
      %s644 = scalar_lea.vmem %s2, 4
      %v645 = vld [vmem:[%s644] sm:$0xf]
      %v654 = vunpack.c.l.b16 %v343
      %v655 = vunpack.c.l.b16 %v347
      %v656 = vunpack.c.l.b16 %v351
      %v657 = vunpack.c.l.b16 %v355
      %v658 = vunpack.c.l.b16 %v359
      %v659 = vunpack.c.l.b16 %v363
      %v660 = vunpack.c.l.b16 %v367
      %v661 = vunpack.c.l.b16 %v371
      %v662 = vpack.c.b16 %v655, %v654
      %v663 = vpack.c.b16 %v657, %v656
      %v664 = vpack.c.b16 %v659, %v658
      %v665 = vpack.c.b16 %v661, %v660
      %v667 = vsel %vm402, %v645, 0
      %v670 = vsel %vm402, %v662, 0
      %v673 = vsel %vm402, %v663, 0
      %v676 = vsel %vm402, %v664, 0
      %v679 = vsel %vm402, %v665, 0
      %681 = vmatprep.subr.bf16.mxu0 0
      %682 = vmatpush1.bf16.xpose.msra.mxu0 0
      %683 = vmatprep.subr.bf16.mxu0 0
      %684 = vmatpush1.bf16.xpose.msra.mxu0 0
      %685 = vmatprep.subr.bf16.mxu0 0
      %686 = vmatpush1.bf16.xpose.msra.mxu0 0
      %687 = vmatprep.subr.bf16.mxu0 0
      %688 = vmatpush1.bf16.xpose.msra.mxu0 0
      %689 = vmatprep.subr.bf16.mxu0 0
      %690 = vmatpush1.bf16.xpose.msra.mxu0 %v679
      %691 = vmatprep.subr.bf16.mxu0 0
      %692 = vmatpush1.bf16.xpose.msra.mxu0 %v676
      %693 = vmatprep.subr.bf16.mxu0 0
      %694 = vmatpush1.bf16.xpose.msra.mxu0 %v673
      %695 = vmatprep.subr.bf16.mxu0 0
      %696 = vmatpush1.bf16.xpose.msra.mxu0 %v670
      %697 = vmatprep.subr.bf16.mxu0 0
      %698 = vmatpush2.bf16.xpose.msra.mxu0 0
      %699 = vmatprep.subr.bf16.mxu0 0
      %700 = vmatpush2.bf16.xpose.msra.mxu0 0
      %701 = vmatprep.subr.bf16.mxu0 0
      %702 = vmatpush2.bf16.xpose.msra.mxu0 0
      %703 = vmatprep.subr.bf16.mxu0 0
      %704 = vmatpush2.bf16.xpose.msra.mxu0 0
      %705 = vmatprep.subr.bf16.mxu0 0
      %706 = vmatpush2.bf16.xpose.msra.mxu0 0
      %707 = vmatprep.subr.bf16.mxu0 0
      %708 = vmatpush2.bf16.xpose.msra.mxu0 0
      %709 = vmatprep.subr.bf16.mxu0 0
      %710 = vmatpush2.bf16.xpose.msra.mxu0 0
      %711 = vmatprep.subr.bf16.mxu0 0
      %712 = vmatpush2.bf16.xpose.msra.mxu0 0
      %713 = vmatprep.mubr.bf16.mxu0 0
      %714 = vmatmul.mubr.bf16.gmra.mxu0 %v667
      %v715 = vpop.f32.mrf.mxu0
      %v716 = vadd.f32 0.0, %v715
      %v717 = vpop.f32.mrf.mxu0
      %v718 = vpop.f32.mrf.mxu0
      %v719 = vpop.f32.mrf.mxu0
      %720 = vdwg.mxu0
      %v721 = vadd.f32 %v643, %v716
      %v723 = vshrl.u32 %v343, 16
      %v725 = vrot.slane %v723, 4
      %v726 = vshll.u32 %v343, 16
      %v728 = vrot.slane %v726, 5
      %v729 = vor.u32 %v725, %v728
      %v730 = vrot.slane %v729, 4
      %v732 = vshll.u32 %v344, 16
      %v734 = vrot.slane %v732, 5
      %v735 = vsel %vm461, %v730, %v734
      %v737 = vshrl.u32 %v347, 16
      %v739 = vrot.slane %v737, 4
      %v740 = vshll.u32 %v347, 16
      %v742 = vrot.slane %v740, 5
      %v743 = vor.u32 %v739, %v742
      %v744 = vrot.slane %v743, 4
      %v746 = vshll.u32 %v348, 16
      %v748 = vrot.slane %v746, 5
      %v749 = vsel %vm461, %v744, %v748
      %v751 = vshrl.u32 %v351, 16
      %v753 = vrot.slane %v751, 4
      %v754 = vshll.u32 %v351, 16
      %v756 = vrot.slane %v754, 5
      %v757 = vor.u32 %v753, %v756
      %v758 = vrot.slane %v757, 4
      %v760 = vshll.u32 %v352, 16
      %v762 = vrot.slane %v760, 5
      %v763 = vsel %vm461, %v758, %v762
      %v765 = vshrl.u32 %v355, 16
      %v767 = vrot.slane %v765, 4
      %v768 = vshll.u32 %v355, 16
      %v770 = vrot.slane %v768, 5
      %v771 = vor.u32 %v767, %v770
      %v772 = vrot.slane %v771, 4
      %v774 = vshll.u32 %v356, 16
      %v776 = vrot.slane %v774, 5
      %v777 = vsel %vm461, %v772, %v776
      %v779 = vshrl.u32 %v359, 16
      %v781 = vrot.slane %v779, 4
      %v782 = vshll.u32 %v359, 16
      %v784 = vrot.slane %v782, 5
      %v785 = vor.u32 %v781, %v784
      %v786 = vrot.slane %v785, 4
      %v788 = vshll.u32 %v360, 16
      %v790 = vrot.slane %v788, 5
      %v791 = vsel %vm461, %v786, %v790
      %v793 = vshrl.u32 %v363, 16
      %v795 = vrot.slane %v793, 4
      %v796 = vshll.u32 %v363, 16
      %v798 = vrot.slane %v796, 5
      %v799 = vor.u32 %v795, %v798
      %v800 = vrot.slane %v799, 4
      %v802 = vshll.u32 %v364, 16
      %v804 = vrot.slane %v802, 5
      %v805 = vsel %vm461, %v800, %v804
      %v807 = vshrl.u32 %v367, 16
      %v809 = vrot.slane %v807, 4
      %v810 = vshll.u32 %v367, 16
      %v812 = vrot.slane %v810, 5
      %v813 = vor.u32 %v809, %v812
      %v814 = vrot.slane %v813, 4
      %v816 = vshll.u32 %v368, 16
      %v818 = vrot.slane %v816, 5
      %v819 = vsel %vm461, %v814, %v818
      %v821 = vshrl.u32 %v371, 16
      %v823 = vrot.slane %v821, 4
      %v824 = vshll.u32 %v371, 16
      %v826 = vrot.slane %v824, 5
      %v827 = vor.u32 %v823, %v826
      %v828 = vrot.slane %v827, 4
      %v830 = vshll.u32 %v372, 16
      %v832 = vrot.slane %v830, 5
      %v833 = vsel %vm461, %v828, %v832
      %s834 = scalar_lea.vmem %s3, 4
      %v835 = vld [vmem:[%s834] sm:$0xf]
      %v836 = vunpack.c.l.b16 %v735
      %v837 = vunpack.c.l.b16 %v749
      %v838 = vunpack.c.l.b16 %v763
      %v839 = vunpack.c.l.b16 %v777
      %v840 = vunpack.c.l.b16 %v791
      %v841 = vunpack.c.l.b16 %v805
      %v842 = vunpack.c.l.b16 %v819
      %v843 = vunpack.c.l.b16 %v833
      %v844 = vpack.c.b16 %v837, %v836
      %v845 = vpack.c.b16 %v839, %v838
      %v846 = vpack.c.b16 %v841, %v840
      %v847 = vpack.c.b16 %v843, %v842
      %v849 = vsel %vm587, %v835, 0
      %v852 = vsel %vm587, %v844, 0
      %v855 = vsel %vm587, %v845, 0
      %v858 = vsel %vm587, %v846, 0
      %v861 = vsel %vm587, %v847, 0
      %863 = vmatprep.subr.bf16.mxu0 0
      %864 = vmatpush1.bf16.xpose.msra.mxu0 0
      %865 = vmatprep.subr.bf16.mxu0 0
      %866 = vmatpush1.bf16.xpose.msra.mxu0 0
      %867 = vmatprep.subr.bf16.mxu0 0
      %868 = vmatpush1.bf16.xpose.msra.mxu0 0
      %869 = vmatprep.subr.bf16.mxu0 0
      %870 = vmatpush1.bf16.xpose.msra.mxu0 0
      %871 = vmatprep.subr.bf16.mxu0 0
      %872 = vmatpush1.bf16.xpose.msra.mxu0 %v861
      %873 = vmatprep.subr.bf16.mxu0 0
      %874 = vmatpush1.bf16.xpose.msra.mxu0 %v858
      %875 = vmatprep.subr.bf16.mxu0 0
      %876 = vmatpush1.bf16.xpose.msra.mxu0 %v855
      %877 = vmatprep.subr.bf16.mxu0 0
      %878 = vmatpush1.bf16.xpose.msra.mxu0 %v852
      %879 = vmatprep.subr.bf16.mxu0 0
      %880 = vmatpush2.bf16.xpose.msra.mxu0 0
      %881 = vmatprep.subr.bf16.mxu0 0
      %882 = vmatpush2.bf16.xpose.msra.mxu0 0
      %883 = vmatprep.subr.bf16.mxu0 0
      %884 = vmatpush2.bf16.xpose.msra.mxu0 0
      %885 = vmatprep.subr.bf16.mxu0 0
      %886 = vmatpush2.bf16.xpose.msra.mxu0 0
      %887 = vmatprep.subr.bf16.mxu0 0
      %888 = vmatpush2.bf16.xpose.msra.mxu0 0
      %889 = vmatprep.subr.bf16.mxu0 0
      %890 = vmatpush2.bf16.xpose.msra.mxu0 0
      %891 = vmatprep.subr.bf16.mxu0 0
      %892 = vmatpush2.bf16.xpose.msra.mxu0 0
      %893 = vmatprep.subr.bf16.mxu0 0
      %894 = vmatpush2.bf16.xpose.msra.mxu0 0
      %895 = vmatprep.mubr.bf16.mxu0 0
      %896 = vmatmul.mubr.bf16.gmra.mxu0 %v849
      %v897 = vpop.f32.mrf.mxu0
      %v898 = vadd.f32 0.0, %v897
      %v899 = vpop.f32.mrf.mxu0
      %v900 = vpop.f32.mrf.mxu0
      %v901 = vpop.f32.mrf.mxu0
      %902 = vdwg.mxu0
      %v903 = vadd.f32 %v721, %v898
      %s904 = scalar_lea.vmem %s2, 8
      %v905 = vld [vmem:[%s904] sm:$0xf]
      %v907 = vunpack.c.l.b16 %v373
      %v908 = vpack.c.b16 %v392, %v391
      %v909 = vpack.c.b16 %v394, %v393
      %v910 = vpack.c.b16 %v396, %v395
      %v911 = vpack.c.b16 %v907, %v397
      %v913 = vsel %vm402, %v905, 0
      %v916 = vsel %vm402, %v908, 0
      %v919 = vsel %vm402, %v909, 0
      %v922 = vsel %vm402, %v910, 0
      %v925 = vsel %vm402, %v911, 0
      %927 = vmatprep.subr.bf16.mxu0 0
      %928 = vmatpush1.bf16.xpose.msra.mxu0 0
      %929 = vmatprep.subr.bf16.mxu0 0
      %930 = vmatpush1.bf16.xpose.msra.mxu0 0
      %931 = vmatprep.subr.bf16.mxu0 0
      %932 = vmatpush1.bf16.xpose.msra.mxu0 0
      %933 = vmatprep.subr.bf16.mxu0 0
      %934 = vmatpush1.bf16.xpose.msra.mxu0 0
      %935 = vmatprep.subr.bf16.mxu0 0
      %936 = vmatpush1.bf16.xpose.msra.mxu0 %v925
      %937 = vmatprep.subr.bf16.mxu0 0
      %938 = vmatpush1.bf16.xpose.msra.mxu0 %v922
      %939 = vmatprep.subr.bf16.mxu0 0
      %940 = vmatpush1.bf16.xpose.msra.mxu0 %v919
      %941 = vmatprep.subr.bf16.mxu0 0
      %942 = vmatpush1.bf16.xpose.msra.mxu0 %v916
      %943 = vmatprep.subr.bf16.mxu0 0
      %944 = vmatpush2.bf16.xpose.msra.mxu0 0
      %945 = vmatprep.subr.bf16.mxu0 0
      %946 = vmatpush2.bf16.xpose.msra.mxu0 0
      %947 = vmatprep.subr.bf16.mxu0 0
      %948 = vmatpush2.bf16.xpose.msra.mxu0 0
      %949 = vmatprep.subr.bf16.mxu0 0
      %950 = vmatpush2.bf16.xpose.msra.mxu0 0
      %951 = vmatprep.subr.bf16.mxu0 0
      %952 = vmatpush2.bf16.xpose.msra.mxu0 0
      %953 = vmatprep.subr.bf16.mxu0 0
      %954 = vmatpush2.bf16.xpose.msra.mxu0 0
      %955 = vmatprep.subr.bf16.mxu0 0
      %956 = vmatpush2.bf16.xpose.msra.mxu0 0
      %957 = vmatprep.subr.bf16.mxu0 0
      %958 = vmatpush2.bf16.xpose.msra.mxu0 0
      %959 = vmatprep.mubr.bf16.mxu0 0
      %960 = vmatmul.mubr.bf16.gmra.mxu0 %v913
      %v961 = vpop.f32.mrf.mxu0
      %v962 = vadd.f32 0.0, %v961
      %v963 = vpop.f32.mrf.mxu0
      %v964 = vpop.f32.mrf.mxu0
      %v965 = vpop.f32.mrf.mxu0
      %966 = vdwg.mxu0
      %v967 = vadd.f32 %v903, %v962
      %v969 = vshrl.u32 %v373, 16
      %v971 = vrot.slane %v969, 4
      %v972 = vshll.u32 %v373, 16
      %v974 = vrot.slane %v972, 5
      %v975 = vor.u32 %v971, %v974
      %v976 = vrot.slane %v975, 4
      %v978 = vshll.u32 %v374, 16
      %v980 = vrot.slane %v978, 5
      %v981 = vsel %vm461, %v976, %v980
      %s982 = scalar_lea.vmem %s3, 8
      %v983 = vld [vmem:[%s982] sm:$0xf]
      %v984 = vunpack.c.l.b16 %v981
      %v985 = vpack.c.b16 %v577, %v576
      %v986 = vpack.c.b16 %v579, %v578
      %v987 = vpack.c.b16 %v581, %v580
      %v988 = vpack.c.b16 %v984, %v582
      %v990 = vsel %vm587, %v983, 0
      %v993 = vsel %vm587, %v985, 0
      %v996 = vsel %vm587, %v986, 0
      %v999 = vsel %vm587, %v987, 0
      %v1002 = vsel %vm587, %v988, 0
      %1004 = vmatprep.subr.bf16.mxu0 0
      %1005 = vmatpush1.bf16.xpose.msra.mxu0 0
      %1006 = vmatprep.subr.bf16.mxu0 0
      %1007 = vmatpush1.bf16.xpose.msra.mxu0 0
      %1008 = vmatprep.subr.bf16.mxu0 0
      %1009 = vmatpush1.bf16.xpose.msra.mxu0 0
      %1010 = vmatprep.subr.bf16.mxu0 0
      %1011 = vmatpush1.bf16.xpose.msra.mxu0 0
      %1012 = vmatprep.subr.bf16.mxu0 0
      %1013 = vmatpush1.bf16.xpose.msra.mxu0 %v1002
      %1014 = vmatprep.subr.bf16.mxu0 0
      %1015 = vmatpush1.bf16.xpose.msra.mxu0 %v999
      %1016 = vmatprep.subr.bf16.mxu0 0
      %1017 = vmatpush1.bf16.xpose.msra.mxu0 %v996
      %1018 = vmatprep.subr.bf16.mxu0 0
      %1019 = vmatpush1.bf16.xpose.msra.mxu0 %v993
      %1020 = vmatprep.subr.bf16.mxu0 0
      %1021 = vmatpush2.bf16.xpose.msra.mxu0 0
      %1022 = vmatprep.subr.bf16.mxu0 0
      %1023 = vmatpush2.bf16.xpose.msra.mxu0 0
      %1024 = vmatprep.subr.bf16.mxu0 0
      %1025 = vmatpush2.bf16.xpose.msra.mxu0 0
      %1026 = vmatprep.subr.bf16.mxu0 0
      %1027 = vmatpush2.bf16.xpose.msra.mxu0 0
      %1028 = vmatprep.subr.bf16.mxu0 0
      %1029 = vmatpush2.bf16.xpose.msra.mxu0 0
      %1030 = vmatprep.subr.bf16.mxu0 0
      %1031 = vmatpush2.bf16.xpose.msra.mxu0 0
      %1032 = vmatprep.subr.bf16.mxu0 0
      %1033 = vmatpush2.bf16.xpose.msra.mxu0 0
      %1034 = vmatprep.subr.bf16.mxu0 0
      %1035 = vmatpush2.bf16.xpose.msra.mxu0 0
      %1036 = vmatprep.mubr.bf16.mxu0 0
      %1037 = vmatmul.mubr.bf16.gmra.mxu0 %v990
      %v1038 = vpop.f32.mrf.mxu0
      %v1039 = vadd.f32 0.0, %v1038
      %v1040 = vpop.f32.mrf.mxu0
      %v1041 = vpop.f32.mrf.mxu0
      %v1042 = vpop.f32.mrf.mxu0
      %1043 = vdwg.mxu0
      %v1044 = vadd.f32 %v967, %v1039
      %vm1045 = vcmask 523264
      %1046 = vst.msk [vmem:[%s339] sm:$0xff] %vm1045, %v1044
      %p1047 = scmp.lt.s32.totalorder %s20, 1
      %s1048 = scalar_select %p1047, %s20, 1
      %p1049 = scmp.lt.s32.totalorder %s21, 0
      %s1050 = scalar_select %p1049, %s21, 0
      %s1051 = sadd.s32 %s1050, %s1048
      %s1052 = smul.addr %s1051, 8
      %s1053 = scalar_lea.vmem %s5, %s1052
      // Predicated region
      $region41: #{downsample_forward.1} parent=39 // pred_check
        %p1054 = pneg %p171
      $region42: #{downsample_forward.1} parent=39 // pred_check_branch
        %1056 = sbr.rel (%p1054) target = $region44
      $region43: #{downsample_forward.1} parent=39 // pred_region
        _
      $region44: #{downsample_forward.1} parent=39 // pred_fallthru
        _
    $region40: #{downsample_forward.1} parent=5 // pred_fallthru
      _
    %p1057 = scmp.le.s32.totalorder 2, %s11
    // Predicated region
    $region45: #{downsample_forward.1} parent=5 // pred_check
      %p1058 = pneg %p1057
    $region46: #{downsample_forward.1} parent=5 // pred_check_branch
      %1060 = sbr.rel (%p1058) target = $region48
    $region47: #{downsample_forward.1} parent=5 // pred_region
      %s1061 = ssub.s32 %s11, 2
      // Predicated region
      $region49: #{downsample_forward.1} parent=47 // pred_check
        %p1062 = pneg %p177
      $region50: #{downsample_forward.1} parent=47 // pred_check_branch
        %1064 = sbr.rel (%p1062) target = $region52
      $region51: #{downsample_forward.1} parent=47 // pred_region
        %p1065 = scmp.lt.s32.totalorder %s22, 1
        %s1066 = scalar_select %p1065, %s22, 1
        %p1067 = scmp.lt.s32.totalorder %s23, 0
        %s1068 = scalar_select %p1067, %s23, 0
        %s1069 = sadd.s32 %s1068, %s1066
        %s1070 = smul.addr %s1069, 8
        %s1071 = scalar_lea.vmem %s5, %s1070
      $region52: #{downsample_forward.1} parent=47 // pred_fallthru
        _
    $region48: #{downsample_forward.1} parent=5 // pred_fallthru
      _
  $region6: #{downsample_forward.1} parent=0 // loop_footer
    %s15 = sadd.s32 1, %s11
  $region7: #{downsample_forward.1} parent=0 // loop_footer_branch
    %10 = sbr.rel target = $region3
  $region8: #{downsample_forward.1} parent=0 // loop_exit
    _

</llo_original>
